<compile_context>
chip_gen: v6e
topology: v6e:2x2x1
jax: 0.10.0
libtpu: 0.0.40
codegen_flags: <defaults>
</compile_context>

<pallas_src>
import functools

import jax
import jax.numpy as jnp
from jax.experimental import pallas as pl
from jax.experimental.pallas import tpu as pltpu


def _sublane_multiple(itemsize: int) -> int:
    # f32 -> 8, bf16/f16 -> 16, int8/fp8 -> 32 (sub-32-bit dtypes pack sublanes).
    return max(8, 32 // max(1, int(itemsize)))


def _chip_config():
    """Return (vmem_working_set_budget_bytes, num_tensorcores), with safe fallbacks."""
    kind = ""
    try:
        kind = jax.devices()[0].device_kind.lower()
    except Exception:  # interpret mode / CPU fallback etc.
        kind = ""
    if "v7" in kind or "tpu7" in kind:
        # v7x: 2 TCs/chip, 64 MiB physical VMEM per TC, 32 MiB default scoped.
        return 20 << 20, 2
    if "v6" in kind:
        # v6e: 1 TC, 128 MiB VMEM, 32 MiB default scoped.
        return 24 << 20, 1
    # v5e (16 MiB default scoped) / v5p / v4 / unknown: most conservative.
    return 12 << 20, 1


def _pick_tn(n, k, itemsize, budget_bytes):
    sub = _sublane_multiple(itemsize)
    # Working-set bytes per row of a (tn, K) block:
    #   2 * K * itemsize   double-buffered input block
    #   16 * K             ~4 live f32 (tn,K) temporaries (t/probs/logits/p*logp)
    #   512                (tn,1) f32 accumulator scratch padded to 128 lanes
    per_row = 2 * k * itemsize + 16 * k + 512
    tn = budget_bytes // per_row
    tn = max(sub, (tn // sub) * sub)
    tn = min(tn, 32768)                       # sanity cap (multiple of 32)
    n_rounded = ((n + sub - 1) // sub) * sub  # never more rows than one padded pass
    return int(min(tn, n_rounded))


def _entropy_sum_kernel(t_ref, o_ref, acc_ref, *, n_total, tn, tiles_per_part):
    """Accumulates the sum of per-row entropies of this part into o_ref (1,1)."""
    p_idx = pl.program_id(0)   # "parallel" part (2nd TensorCore on v7x)
    t_idx = pl.program_id(1)   # "arbitrary" reduction axis over row tiles

    @pl.when(t_idx == 0)
    def _():
        acc_ref[...] = jnp.zeros_like(acc_ref)

    t = t_ref[...].astype(jnp.float32)                        # (TN, K)

    # Normalize: one exact reciprocal per row + broadcast multiply
    # (instead of TN*K divides).
    row_sum = jnp.sum(t, axis=-1, keepdims=True)              # (TN, 1)
    probs = t * (1.0 / row_sum)                               # (TN, K)

    # torch probs_to_logits: log(clamp(probs, eps, 1 - eps)).  The clamp bounds
    # the log, so no extra maximum(logits, finfo.min) is needed.
    eps = jnp.finfo(jnp.float32).eps
    logits = jnp.log(jnp.clip(probs, eps, 1.0 - eps))         # (TN, K)

    ent = -jnp.sum(probs * logits, axis=-1, keepdims=True)    # (TN, 1)

    # Mask rows past the logical N (partial last tile / padded grid step).
    # jnp.where is a select, so NaN/garbage in padding rows never leaks.
    tile_start = (p_idx * tiles_per_part + t_idx) * tn
    row_ids = tile_start + jax.lax.broadcasted_iota(jnp.int32, (tn, 1), 0)
    ent = jnp.where(row_ids < n_total, ent, 0.0)

    # Hot loop only touches the VMEM scratch; the lane-sparse (1,1) output is
    # written once per part.
    acc_ref[...] += ent

    @pl.when(t_idx == tiles_per_part - 1)
    def _():
        o_ref[...] = jnp.sum(acc_ref[...], axis=0, keepdims=True)   # (1, 1)


def entropy_loss(input_unused, target, *, tn=None):
    """Pallas equivalent of EntropyLoss.forward(input, target).

    target: (N, K) array of (unnormalized) categorical probabilities.
    Returns a scalar float32: mean entropy across the N distributions.
    """
    del input_unused  # the reference module never uses `input`
    n, k = target.shape
    itemsize = jnp.dtype(target.dtype).itemsize
    sub = _sublane_multiple(itemsize)
    budget, num_tc = _chip_config()

    if tn is None:
        tn = _pick_tn(n, k, itemsize, budget)
    else:
        tn = max(sub, (int(tn) // sub) * sub)          # respect dtype sublane packing
        tn = min(tn, ((n + sub - 1) // sub) * sub)

    n_tiles = pl.cdiv(n, tn)
    # Only split across TensorCores when there actually are two of them (v7x).
    n_parallel = 2 if (num_tc >= 2 and n_tiles >= 2) else 1
    tiles_per_part = pl.cdiv(n_tiles, n_parallel)

    if n_parallel * tiles_per_part > n_tiles:
        # Uneven split: the last step of the last part would index one block past
        # the end.  Clamp the block index (that step's rows are masked in-kernel).
        def in_index_map(p, t):
            return (jnp.minimum(p * tiles_per_part + t, n_tiles - 1), 0)
    else:
        def in_index_map(p, t):
            return (p * tiles_per_part + t, 0)

    kernel = functools.partial(
        _entropy_sum_kernel, n_total=n, tn=tn, tiles_per_part=tiles_per_part)

    partial_sums = pl.pallas_call(
        kernel,
        out_shape=jax.ShapeDtypeStruct((n_parallel, 1), jnp.float32),
        grid_spec=pltpu.PrefetchScalarGridSpec(
            num_scalar_prefetch=0,
            grid=(n_parallel, tiles_per_part),
            in_specs=[pl.BlockSpec((tn, k), in_index_map)],
            out_specs=pl.BlockSpec((1, 1), lambda p, t: (p, 0)),
            scratch_shapes=[pltpu.VMEM((tn, 1), jnp.float32)],
        ),
        compiler_params=pltpu.CompilerParams(
            dimension_semantics=("parallel", "arbitrary")),
    )(target)

    # Finish in the wrapper: sum per-part partials, divide by the GLOBAL N.
    return jnp.sum(partial_sums) / jnp.float32(n)


def _reference(target):
    # pure-JAX mirror of torch.distributions.Categorical(target).entropy().mean()
    t = target.astype(jnp.float32)
    probs = t / jnp.sum(t, axis=-1, keepdims=True)
    eps = jnp.finfo(jnp.float32).eps
    logits = jnp.log(jnp.clip(probs, eps, 1.0 - eps))
    logits = jnp.maximum(logits, jnp.finfo(jnp.float32).min)
    ent = -jnp.sum(probs * logits, axis=-1)
    return jnp.mean(ent)


if __name__ == "__main__":
    key = jax.random.PRNGKey(0)
    k_in, k_tgt = jax.random.split(key)

    # N=56 rows over K=128 categories.
    N, K = 56, 128
    x = jax.random.normal(k_in, (N, K), dtype=jnp.float32)       # unused input
    target = jax.random.uniform(k_tgt, (N, K), dtype=jnp.float32,
                                minval=0.05, maxval=1.0)
    ref = _reference(target)

    # 1) Auto block sizing (byte-budget-derived tn -> single tile at this size).
    out_auto = jax.block_until_ready(entropy_loss(x, target))
    assert jnp.allclose(out_auto, ref, rtol=1e-5, atol=1e-5), (out_auto, ref)

    # 2) Forced small tile: exercises the multi-tile grid, the resident VMEM
    #    accumulator across the reduction axis, and partial-tile masking
    #    (56 is not a multiple of 16).
    out_tiled = jax.block_until_ready(entropy_loss(x, target, tn=16))
    assert jnp.allclose(out_tiled, ref, rtol=1e-5, atol=1e-5), (out_tiled, ref)

    # 3) bf16 target: exercises the 16-row sublane rounding and in-kernel f32 cast.
    target_bf16 = target.astype(jnp.bfloat16)
    ref_bf16 = _reference(target_bf16)
    out_bf16 = jax.block_until_ready(entropy_loss(x, target_bf16))
    assert jnp.allclose(out_bf16, ref_bf16, rtol=1e-5, atol=1e-4), (out_bf16, ref_bf16)

    print("KERNEL_OK")
</pallas_src>

<mosaic_0001>
module attributes {stable_mosaic.version = 11 : i64} {
  func.func @_entropy_sum_kernel(%arg0: i32, %arg1: i32, %arg2: memref<56x128xf32, #tpu.memory_space<vmem>>, %arg3: memref<1x1xf32, #tpu.memory_space<vmem>>, %arg4: memref<56x1xf32, #tpu.memory_space<vmem>>) attributes {dimension_semantics = [#tpu.dimension_semantics<parallel>, #tpu.dimension_semantics<arbitrary>], iteration_bounds = array<i64: 1, 1>, scalar_prefetch = 0 : i64, scratch_operands = 1 : i64, tpu.core_type = #tpu.core_type<tc>, window_params = [{transform_indices = @transform_0, window_bounds = array<i64: 56, 128>}, {transform_indices = @transform_1, window_bounds = array<i64: 1, 1>}]} {
    %c0_i32 = arith.constant 0 : i32
    %0 = arith.cmpi eq, %arg1, %c0_i32 : i32
    %1 = arith.extui %0 : i1 to i32
    %c0_i32_0 = arith.constant 0 : i32
    %2 = arith.cmpi ne, %1, %c0_i32_0 : i32
    scf.if %2 {
      %cst_15 = arith.constant 0.000000e+00 : f32
      %36 = vector.broadcast %cst_15 : f32 to vector<56x1xf32>
      %c0_16 = arith.constant 0 : index
      %c0_17 = arith.constant 0 : index
      %37 = vector.load %arg4[%c0_16, %c0_17] : memref<56x1xf32, #tpu.memory_space<vmem>>, vector<56x1xf32>
      tpu.vector_store %arg4[%c0_16, %c0_17], %36 {strides = array<i32>} : memref<56x1xf32, #tpu.memory_space<vmem>>, vector<56x1xf32>,
    } else {
    }
    %c0 = arith.constant 0 : index
    %c0_1 = arith.constant 0 : index
    %3 = vector.load %arg2[%c0, %c0_1] : memref<56x128xf32, #tpu.memory_space<vmem>>, vector<56x128xf32>
    %cst = arith.constant dense<0.000000e+00> : vector<56xf32>
    %4 = vector.multi_reduction <add>, %3, %cst [1] : vector<56x128xf32> to vector<56xf32>
    %5 = vector.shape_cast %4 : vector<56xf32> to vector<56x1xf32>
    %cst_2 = arith.constant 1.000000e+00 : f32
    %6 = vector.broadcast %cst_2 : f32 to vector<56x1xf32>
    %7 = arith.divf %6, %5 : vector<56x1xf32>
    %8 = vector.broadcast %7 : vector<56x1xf32> to vector<56x128xf32>
    %9 = arith.mulf %3, %8 : vector<56x128xf32>
    %cst_3 = arith.constant 1.1920929E-7 : f32
    %cst_4 = arith.constant 0.99999988 : f32
    %10 = vector.broadcast %cst_3 : f32 to vector<56x128xf32>
    %11 = arith.maximumf %10, %9 : vector<56x128xf32>
    %12 = vector.broadcast %cst_4 : f32 to vector<56x128xf32>
    %13 = arith.minimumf %12, %11 : vector<56x128xf32>
    %14 = math.log %13 : vector<56x128xf32>
    %15 = arith.mulf %9, %14 : vector<56x128xf32>
    %cst_5 = arith.constant dense<0.000000e+00> : vector<56xf32>
    %16 = vector.multi_reduction <add>, %15, %cst_5 [1] : vector<56x128xf32> to vector<56xf32>
    %17 = vector.shape_cast %16 : vector<56xf32> to vector<56x1xf32>
    %cst_6 = arith.constant 0.000000e+00 : f32
    %18 = vector.broadcast %cst_6 : f32 to vector<56x1xf32>
    %19 = arith.subf %18, %17 : vector<56x1xf32>
    %c1_i32 = arith.constant 1 : i32
    %20 = arith.muli %arg0, %c1_i32 : i32
    %21 = arith.addi %20, %arg1 : i32
    %c56_i32 = arith.constant 56 : i32
    %22 = arith.muli %21, %c56_i32 : i32
    %23 = tpu.iota {dimensions = array<i32: 0>} : vector<56x1xi32>
    %24 = vector.broadcast %22 : i32 to vector<56x1xi32>
    %25 = arith.addi %24, %23 : vector<56x1xi32>
    %c56_i32_7 = arith.constant 56 : i32
    %26 = vector.broadcast %c56_i32_7 : i32 to vector<56x1xi32>
    %27 = arith.cmpi slt, %25, %26 : vector<56x1xi32>
    %cst_8 = arith.constant 0.000000e+00 : f32
    %28 = vector.broadcast %cst_8 : f32 to vector<56x1xf32>
    %29 = arith.select %27, %19, %28 : vector<56x1xi1>, vector<56x1xf32>
    %c0_9 = arith.constant 0 : index
    %c0_10 = arith.constant 0 : index
    %30 = vector.load %arg4[%c0_9, %c0_10] : memref<56x1xf32, #tpu.memory_space<vmem>>, vector<56x1xf32>
    %31 = arith.addf %30, %29 : vector<56x1xf32>
    %c0_11 = arith.constant 0 : index
    %c0_12 = arith.constant 0 : index
    %32 = vector.load %arg4[%c0_11, %c0_12] : memref<56x1xf32, #tpu.memory_space<vmem>>, vector<56x1xf32>
    tpu.vector_store %arg4[%c0_11, %c0_12], %31 {strides = array<i32>} : memref<56x1xf32, #tpu.memory_space<vmem>>, vector<56x1xf32>,
    %c0_i32_13 = arith.constant 0 : i32
    %33 = arith.cmpi eq, %arg1, %c0_i32_13 : i32
    %34 = arith.extui %33 : i1 to i32
    %c0_i32_14 = arith.constant 0 : i32
    %35 = arith.cmpi ne, %34, %c0_i32_14 : i32
    scf.if %35 {
      %c0_15 = arith.constant 0 : index
      %c0_16 = arith.constant 0 : index
      %36 = vector.load %arg4[%c0_15, %c0_16] : memref<56x1xf32, #tpu.memory_space<vmem>>, vector<56x1xf32>
      %cst_17 = arith.constant dense<0.000000e+00> : vector<1xf32>
      %37 = vector.multi_reduction <add>, %36, %cst_17 [0] : vector<56x1xf32> to vector<1xf32>
      %38 = vector.shape_cast %37 : vector<1xf32> to vector<1x1xf32>
      %c0_18 = arith.constant 0 : index
      %c0_19 = arith.constant 0 : index
      %39 = vector.load %arg3[%c0_18, %c0_19] : memref<1x1xf32, #tpu.memory_space<vmem>>, vector<1x1xf32>
      tpu.vector_store %arg3[%c0_18, %c0_19], %38 {strides = array<i32>} : memref<1x1xf32, #tpu.memory_space<vmem>>, vector<1x1xf32>,
    } else {
    }
    return
  }
  func.func @transform_0(%arg0: i32, %arg1: i32) -> (i32, i32) {
    %c1_i32 = arith.constant 1 : i32
    %0 = arith.muli %arg0, %c1_i32 : i32
    %1 = arith.addi %0, %arg1 : i32
    %c0_i32 = arith.constant 0 : i32
    %c0_i32_0 = arith.constant 0 : i32
    return %1, %c0_i32 : i32, i32
  }
  func.func @transform_1(%arg0: i32, %arg1: i32) -> (i32, i32) {
    %c0_i32 = arith.constant 0 : i32
    %c0_i32_0 = arith.constant 0 : i32
    return %arg0, %c0_i32 : i32, i32
  }
}

</mosaic_0001>

<llo_original>
// kernel: tpu_custom_call.1
$region0: #{tpu_custom_call.1}
  #allocation0 [shape = 'u32[]', space=smem, size = 0x4, offset = 0x4, fixed_abs, tag = 'smem constant byte address 0x4 - core index']
  #allocation1 [shape = 'u32[144,128]{1,0:T(1,128)}', space=vmem, size = 0x12000, scoped, tag = 'internal scratch']
  #allocation2 [shape = 'f32[56,1]{1,0:T(8,128)}', space=vmem, size = 0x7000, scoped, tag = 'scratch operand']
  %s0 = inlined_call_operand.hbm [shape: f32[56,128], index: 0, kind: input, shape index: {}]
  %s1 = inlined_call_operand.hbm [shape: f32[1,1], index: 1, kind: output, shape index: {}]
  %s2 = sld [smem:[#allocation0]]
  $region26: #{tpu_custom_call.1} parent=0
    _
  %s4 = ssub.s32 1, %s2
  %s5 = scalar_select 0, %s4, %s2
  $region1: #{tpu_custom_call.1} parent=0
    #allocation3 [shape = 'u8[28672]{0}', space=vmem, size = 0x7000, scoped, tag = 'input window, operand 0, single buffered']
    #allocation4 [shape = 's32[1]{0}', space=sflag, size = 0x4, scoped, tag = 'scoped memory for tpu_custom_call.1']
    #allocation5 [shape = 's32[1]{0}', space=sflag, size = 0x4, scoped, tag = 'scoped memory for tpu_custom_call.1']
    #allocation6 [shape = 'u8[512]{0}', space=vmem, size = 0x400, scoped, tag = 'output window, operand 0, single buffered']
    %6 = vsyncpa [#allocation4], 0
    %7 = vsyncpa [#allocation5], 0
    // Predicated region
    $region2: #{tpu_custom_call.1} parent=1 // pred_check
      _
    $region3: #{tpu_custom_call.1} parent=1 // pred_check_branch
      %9 = sbr.rel (0) target = $region5
    $region4: #{tpu_custom_call.1} parent=1 // pred_region
      %s10 = sadd.s32 0, 0
      %s11 = smul.u32 7, %s10
      %s13 = ssub.s32 896, 896
      %14 = vsyncadd [#allocation4], %s13
      %s15 = smul.addr %s11, 128
      %s16 = scalar_lea.hbm %s0, %s15
      %s17 = sshll.u32 [#allocation3], 4
      %s18 = int_to_ptr.vmem [resolvable:$true] %s17
      %23 = dma.hbm_to_vmem [thread:$0]  %s16, 896, %s18, [#allocation4], 128, 128, 8
    $region5: #{tpu_custom_call.1} parent=1 // pred_fallthru
      _
    // Predicated region
    $region6: #{tpu_custom_call.1} parent=1 // pred_check
      _
    $region7: #{tpu_custom_call.1} parent=1 // pred_check_branch
      %25 = sbr.rel (0) target = $region9
    $region8: #{tpu_custom_call.1} parent=1 // pred_region
      %26 = dma.done [#allocation4], 896
    $region9: #{tpu_custom_call.1} parent=1 // pred_fallthru
      _
    %s27 = sadd.s32 0, 0
    %s28 = smul.u32 7, %s27
    %p29 = scmp.eq.s32.totalorder 0, 0
    // Predicated region
    $region10: #{tpu_custom_call.1} parent=1 // pred_check
      %p30 = pneg %p29
    $region11: #{tpu_custom_call.1} parent=1 // pred_check_branch
      %32 = sbr.rel (%p30) target = $region13
    $region12: #{tpu_custom_call.1} parent=1 // pred_region
      %vm33 = vcmask 7168
      %34 = vst.msk [vmem:[#allocation2] sm:$0xff] %vm33, 0.0
      %35 = vst.msk [vmem:[#allocation2 + $0x8] sm:$0xff] %vm33, 0.0
      %36 = vst.msk [vmem:[#allocation2 + $0x10] sm:$0xff] %vm33, 0.0
      %37 = vst.msk [vmem:[#allocation2 + $0x18] sm:$0xff] %vm33, 0.0
      %38 = vst.msk [vmem:[#allocation2 + $0x20] sm:$0xff] %vm33, 0.0
      %39 = vst.msk [vmem:[#allocation2 + $0x28] sm:$0xff] %vm33, 0.0
      %40 = vst.msk [vmem:[#allocation2 + $0x30] sm:$0xff] %vm33, 0.0
    $region13: #{tpu_custom_call.1} parent=1 // pred_fallthru
      _
    %v41 = vld [vmem:[#allocation3] sm:$0xff]
    %v42 = vld [vmem:[#allocation3 + $0x8] sm:$0xff]
    %v43 = vld [vmem:[#allocation3 + $0x10] sm:$0xff]
    %v44 = vld [vmem:[#allocation3 + $0x18] sm:$0xff]
    %v45 = vld [vmem:[#allocation3 + $0x20] sm:$0xff]
    %v46 = vld [vmem:[#allocation3 + $0x28] sm:$0xff]
    %v47 = vld [vmem:[#allocation3 + $0x30] sm:$0xff]
    %48 = vadd.xlane.f32.xlu0 %v41
    %v49 = vpop.xlane.xlu0 %48
    %50 = vadd.xlane.f32.xlu0 %v42
    %v51 = vpop.xlane.xlu0 %50
    %52 = vadd.xlane.f32.xlu0 %v43
    %v53 = vpop.xlane.xlu0 %52
    %54 = vadd.xlane.f32.xlu0 %v44
    %v55 = vpop.xlane.xlu0 %54
    %56 = vadd.xlane.f32.xlu0 %v45
    %v57 = vpop.xlane.xlu0 %56
    %58 = vadd.xlane.f32.xlu0 %v46
    %v59 = vpop.xlane.xlu0 %58
    %60 = vadd.xlane.f32.xlu0 %v47
    %v61 = vpop.xlane.xlu0 %60
    %v62 = vrcp.pop %v49
    %v63 = vmul.f32 1.0, %v62
    %v64 = vrcp.pop %v51
    %v65 = vmul.f32 1.0, %v64
    %v66 = vrcp.pop %v53
    %v67 = vmul.f32 1.0, %v66
    %v68 = vrcp.pop %v55
    %v69 = vmul.f32 1.0, %v68
    %v70 = vrcp.pop %v57
    %v71 = vmul.f32 1.0, %v70
    %v72 = vrcp.pop %v59
    %v73 = vmul.f32 1.0, %v72
    %v74 = vrcp.pop %v61
    %v75 = vmul.f32 1.0, %v74
    %v76 = vmul.f32 %v41, %v63
    %v77 = vmul.f32 %v42, %v65
    %v78 = vmul.f32 %v43, %v67
    %v79 = vmul.f32 %v44, %v69
    %v80 = vmul.f32 %v45, %v71
    %v81 = vmul.f32 %v46, %v73
    %v82 = vmul.f32 %v47, %v75
    %v83 = vmax.f32 %v76, 1.1920929e-07
    %v84 = vmax.f32 %v77, 1.1920929e-07
    %v85 = vmax.f32 %v78, 1.1920929e-07
    %v86 = vmax.f32 %v79, 1.1920929e-07
    %v87 = vmax.f32 %v80, 1.1920929e-07
    %v88 = vmax.f32 %v81, 1.1920929e-07
    %v89 = vmax.f32 %v82, 1.1920929e-07
    %v90 = vmin.f32 %v83, 0.9999999
    %v91 = vmin.f32 %v84, 0.9999999
    %v92 = vmin.f32 %v85, 0.9999999
    %v93 = vmin.f32 %v86, 0.9999999
    %v94 = vmin.f32 %v87, 0.9999999
    %v95 = vmin.f32 %v88, 0.9999999
    %v96 = vmin.f32 %v89, 0.9999999
    %v97 = vlog2.pop %v90
    %v98 = vmul.f32 %v97, 0.6931472
    %v99 = vlog2.pop %v91
    %v100 = vmul.f32 %v99, 0.6931472
    %v101 = vlog2.pop %v92
    %v102 = vmul.f32 %v101, 0.6931472
    %v103 = vlog2.pop %v93
    %v104 = vmul.f32 %v103, 0.6931472
    %v105 = vlog2.pop %v94
    %v106 = vmul.f32 %v105, 0.6931472
    %v107 = vlog2.pop %v95
    %v108 = vmul.f32 %v107, 0.6931472
    %v109 = vlog2.pop %v96
    %v110 = vmul.f32 %v109, 0.6931472
    %v111 = vmul.f32 %v76, %v98
    %v112 = vmul.f32 %v77, %v100
    %v113 = vmul.f32 %v78, %v102
    %v114 = vmul.f32 %v79, %v104
    %v115 = vmul.f32 %v80, %v106
    %v116 = vmul.f32 %v81, %v108
    %v117 = vmul.f32 %v82, %v110
    %118 = vadd.xlane.f32.xlu0 %v111
    %v119 = vpop.xlane.xlu0 %118
    %120 = vadd.xlane.f32.xlu0 %v112
    %v121 = vpop.xlane.xlu0 %120
    %122 = vadd.xlane.f32.xlu0 %v113
    %v123 = vpop.xlane.xlu0 %122
    %124 = vadd.xlane.f32.xlu0 %v114
    %v125 = vpop.xlane.xlu0 %124
    %126 = vadd.xlane.f32.xlu0 %v115
    %v127 = vpop.xlane.xlu0 %126
    %128 = vadd.xlane.f32.xlu0 %v116
    %v129 = vpop.xlane.xlu0 %128
    %130 = vadd.xlane.f32.xlu0 %v117
    %v131 = vpop.xlane.xlu0 %130
    %v132 = vsub.f32 0.0, %v119
    %v133 = vsub.f32 0.0, %v121
    %v134 = vsub.f32 0.0, %v123
    %v135 = vsub.f32 0.0, %v125
    %v136 = vsub.f32 0.0, %v127
    %v137 = vsub.f32 0.0, %v129
    %v138 = vsub.f32 0.0, %v131
    %s139 = sadd.s32 0, 0
    %s140 = smul.u32 %s139, 56
    %v141 = vlaneseq
    %v142 = vshrl.u32 %v141, 7
    %v143 = vadd.s32 %v142, 8
    %v144 = vadd.s32 %v142, 16
    %v145 = vadd.s32 %v142, 24
    %v146 = vadd.s32 %v142, 32
    %v147 = vadd.s32 %v142, 40
    %v148 = vadd.s32 %v142, 48
    %v149 = vstv %s140
    %v150 = vadd.s32 %v149, %v142
    %v151 = vadd.s32 %v149, %v143
    %v152 = vadd.s32 %v149, %v144
    %v153 = vadd.s32 %v149, %v145
    %v154 = vadd.s32 %v149, %v146
    %v155 = vadd.s32 %v149, %v147
    %v156 = vadd.s32 %v149, %v148
    %vm157 = vcmp.lt.s32.totalorder %v150, 56
    %vm158 = vcmp.lt.s32.totalorder %v151, 56
    %vm159 = vcmp.lt.s32.totalorder %v152, 56
    %vm160 = vcmp.lt.s32.totalorder %v153, 56
    %vm161 = vcmp.lt.s32.totalorder %v154, 56
    %vm162 = vcmp.lt.s32.totalorder %v155, 56
    %vm163 = vcmp.lt.s32.totalorder %v156, 56
    %v164 = vsel %vm157, %v132, 0.0
    %v165 = vsel %vm158, %v133, 0.0
    %v166 = vsel %vm159, %v134, 0.0
    %v167 = vsel %vm160, %v135, 0.0
    %v168 = vsel %vm161, %v136, 0.0
    %v169 = vsel %vm162, %v137, 0.0
    %v170 = vsel %vm163, %v138, 0.0
    %v171 = vld [vmem:[#allocation2] sm:$0xff]
    %v172 = vld [vmem:[#allocation2 + $0x8] sm:$0xff]
    %v173 = vld [vmem:[#allocation2 + $0x10] sm:$0xff]
    %v174 = vld [vmem:[#allocation2 + $0x18] sm:$0xff]
    %v175 = vld [vmem:[#allocation2 + $0x20] sm:$0xff]
    %v176 = vld [vmem:[#allocation2 + $0x28] sm:$0xff]
    %v177 = vld [vmem:[#allocation2 + $0x30] sm:$0xff]
    %v178 = vadd.f32 %v171, %v164
    %v179 = vadd.f32 %v172, %v165
    %v180 = vadd.f32 %v173, %v166
    %v181 = vadd.f32 %v174, %v167
    %v182 = vadd.f32 %v175, %v168
    %v183 = vadd.f32 %v176, %v169
    %v184 = vadd.f32 %v177, %v170
    %vm185 = vcmask 7168
    %186 = vst.msk [vmem:[#allocation2] sm:$0xff] %vm185, %v178
    %187 = vst.msk [vmem:[#allocation2 + $0x8] sm:$0xff] %vm185, %v179
    %188 = vst.msk [vmem:[#allocation2 + $0x10] sm:$0xff] %vm185, %v180
    %189 = vst.msk [vmem:[#allocation2 + $0x18] sm:$0xff] %vm185, %v181
    %190 = vst.msk [vmem:[#allocation2 + $0x20] sm:$0xff] %vm185, %v182
    %191 = vst.msk [vmem:[#allocation2 + $0x28] sm:$0xff] %vm185, %v183
    %192 = vst.msk [vmem:[#allocation2 + $0x30] sm:$0xff] %vm185, %v184
    // Predicated region
    $region14: #{tpu_custom_call.1} parent=1 // pred_check
      %p193 = pneg %p29
    $region15: #{tpu_custom_call.1} parent=1 // pred_check_branch
      %195 = sbr.rel (%p193) target = $region17
    $region16: #{tpu_custom_call.1} parent=1 // pred_region
      %v196 = vld [vmem:[#allocation2] sm:$0xff]
      %v197 = vld [vmem:[#allocation2 + $0x8] sm:$0xff]
      %v198 = vld [vmem:[#allocation2 + $0x10] sm:$0xff]
      %v199 = vld [vmem:[#allocation2 + $0x18] sm:$0xff]
      %v200 = vld [vmem:[#allocation2 + $0x20] sm:$0xff]
      %v201 = vld [vmem:[#allocation2 + $0x28] sm:$0xff]
      %v202 = vld [vmem:[#allocation2 + $0x30] sm:$0xff]
      %v203 = vsel %vm185, %v196, 0.0
      %v204 = vsel %vm185, %v197, 0.0
      %v205 = vadd.f32 %v203, %v204
      %v206 = vsel %vm185, %v198, 0.0
      %v207 = vadd.f32 %v205, %v206
      %v208 = vsel %vm185, %v199, 0.0
      %v209 = vadd.f32 %v207, %v208
      %v210 = vsel %vm185, %v200, 0.0
      %v211 = vadd.f32 %v209, %v210
      %v212 = vsel %vm185, %v201, 0.0
      %v213 = vadd.f32 %v211, %v212
      %v214 = vsel %vm185, %v202, 0.0
      %v215 = vadd.f32 %v213, %v214
      %v216 = vrot.slane %v215, 4
      %v217 = vadd.f32 %v215, %v216
      %v218 = vrot.slane %v217, 2
      %v219 = vadd.f32 %v217, %v218
      %v220 = vrot.slane %v219, 1
      %v221 = vadd.f32 %v219, %v220
      %vm222 = vcmask 0
      %223 = vst.msk [vmem:[#allocation6] sm:$0x1] %vm222, %v221
    $region17: #{tpu_custom_call.1} parent=1 // pred_fallthru
      _
    // Predicated region
    $region18: #{tpu_custom_call.1} parent=1 // pred_check
      _
    $region19: #{tpu_custom_call.1} parent=1 // pred_check_branch
      %225 = sbr.rel (0) target = $region21
    $region20: #{tpu_custom_call.1} parent=1 // pred_region
      %s227 = ssub.s32 16, 16
      %228 = vsyncadd [#allocation5], %s227
      %s230 = sshll.u32 [#allocation6], 4
      %s231 = int_to_ptr.vmem [resolvable:$true] %s230
      %233 = dma.vmem_to_hbm [thread:$0]  %s231, 16, %s1, [#allocation5]
    $region21: #{tpu_custom_call.1} parent=1 // pred_fallthru
      _
    // Predicated region
    $region22: #{tpu_custom_call.1} parent=1 // pred_check
      _
    $region23: #{tpu_custom_call.1} parent=1 // pred_check_branch
      %235 = sbr.rel (0) target = $region25
    $region24: #{tpu_custom_call.1} parent=1 // pred_region
      %236 = dma.done [#allocation5], 16
    $region25: #{tpu_custom_call.1} parent=1 // pred_fallthru
      _
    %237 = vsyncpa [#allocation4], 1
    %238 = vsyncpa [#allocation5], 1

</llo_original>
